<compile_context>
chip_gen: v6e
topology: v6e:2x2x1
jax: 0.10.0
libtpu: 0.0.40
codegen_flags: <defaults>
</compile_context>

<pallas_src>
import math

import jax
import jax.numpy as jnp
from jax.experimental import pallas as pl
from jax.experimental.pallas import tpu as pltpu


def _round_up(x: int, m: int) -> int:
    return ((x + m - 1) // m) * m


def _lane_pad(n: int) -> int:
    # VMEM lane padding granularity.
    return _round_up(n, 128)


_STREAM_VMEM_BUDGET = 40 * 1024 * 1024   # double-buffered streamed blocks
_VMEM_LIMIT_BYTES = 56 * 1024 * 1024     # < 64 MiB physical on v7x


def _encoder_kernel(obs_ref, act_ref, w1_ref, b1_ref, w2o_ref, w2a_ref, b2_ref,
                    out_ref):
    # Layer 1: (block-diagonal) Linear + ReLU, f32 accumulation on the MXU.
    h = jnp.dot(obs_ref[...], w1_ref[...], preferred_element_type=jnp.float32)
    h = jnp.maximum(h + b1_ref[...].astype(jnp.float32), 0.0)
    # Keep layer-2 matmuls native width (bf16 MXU path when params are bf16).
    h = h.astype(w2o_ref.dtype)

    # Layer 2 on concat([h, actions]) == h @ W2_obs + actions @ W2_act (exact fold).
    z = jnp.dot(h, w2o_ref[...], preferred_element_type=jnp.float32)
    z = z + jnp.dot(act_ref[...], w2a_ref[...],
                    preferred_element_type=jnp.float32)
    z = jnp.maximum(z + b2_ref[...].astype(jnp.float32), 0.0)

    out_ref[...] = z.astype(out_ref.dtype)


def pack_params(params, pack: int = 4):
    """Build block-diagonal (lane-packed) weights once at init time.

    params: dict with w1 [obs_dim, H1], b1 [1, H1], w2_obs [H1, H2],
            w2_act [action_dim, H2], b2 [1, H2].
    Returns the same keys with block-diagonal weights ([d_in*p, d_out*p]) and
    lane-tiled biases ([1, d_out*p]).
    """
    def bd(w):
        return jnp.kron(jnp.eye(pack, dtype=w.dtype), w)

    def tile_bias(bias):
        return jnp.tile(bias, (1, pack))

    return {
        "w1": bd(params["w1"]),
        "b1": tile_bias(params["b1"]),
        "w2_obs": bd(params["w2_obs"]),
        "w2_act": bd(params["w2_act"]),
        "b2": tile_bias(params["b2"]),
    }


def state_action_encoder(obs, actions, packed_params, *, pack: int = 4,
                         block_rows: int = 32768):
    """Fused StateActionEncoder forward.

    obs:           [B, obs_dim]     (f32 or bf16; bf16 I/O recommended)
    actions:       [B, action_dim]  (same batch; any float dtype)
    packed_params: output of pack_params(raw_params, pack)
    pack:          logical rows packed per lane-dense packed row (4 or 8)
    block_rows:    logical batch rows per grid step (tile)
    returns:       [B, H2] in obs.dtype
    """
    b, obs_dim = obs.shape
    b_act, action_dim = actions.shape
    assert b == b_act
    p = pack
    w1, b1 = packed_params["w1"], packed_params["b1"]
    w2o, w2a = packed_params["w2_obs"], packed_params["w2_act"]
    b2b = packed_params["b2"]
    assert w1.shape[0] == obs_dim * p and w2a.shape[0] == action_dim * p
    h1p, h2p = w1.shape[1], w2o.shape[1]
    h1, h2 = h1p // p, h2p // p
    out_dtype = obs.dtype

    # --- Lane packing: p logical rows per packed row (free row-major reshape).
    b_pad = _round_up(b, p)
    if b_pad != b:
        # At most p-1 rows; the common B % p == 0 case is copy-free.
        obs = jnp.pad(obs, ((0, b_pad - b), (0, 0)))
        actions = jnp.pad(actions, ((0, b_pad - b), (0, 0)))
    bp = b_pad // p
    obs_p = obs.reshape(bp, obs_dim * p)
    act_p = actions.reshape(bp, action_dim * p)

    # --- Tile selection: big (amortize ~0.35us/step), 16-sublane aligned,
    #     capped so the double-buffered streamed working set fits the budget.
    in_it = obs.dtype.itemsize
    act_it = actions.dtype.itemsize
    out_it = jnp.dtype(out_dtype).itemsize
    row_bytes = 2 * (_lane_pad(obs_dim * p) * in_it
                     + _lane_pad(action_dim * p) * act_it
                     + _lane_pad(h2p) * out_it)
    tb_cap = max(16, (_STREAM_VMEM_BUDGET // row_bytes) // 16 * 16)
    tb = max(16, _round_up(max(1, block_rows // p), 16))
    tb = min(tb, tb_cap)
    if bp <= tb:
        if bp > 256:
            # Keep >= 2 grid steps so the batch axis can shard across the two
            # v7x TensorCores.
            tb = _round_up(pl.cdiv(bp, 2), 16)
        else:
            tb = bp  # single full-extent block (no masking needed)
    grid = (pl.cdiv(bp, tb),)   # ragged last block handled by Pallas masking

    def row_spec(lanes):
        return pl.BlockSpec((tb, lanes), lambda i: (i, 0))

    def const_spec(arr):
        # Same block every step -> stays resident in VMEM.
        return pl.BlockSpec(arr.shape, lambda i: (0,) * arr.ndim)

    weight_bytes = sum(int(v.size) * v.dtype.itemsize
                       for v in (w1, b1, w2o, w2a, b2b))
    cost = pl.CostEstimate(
        flops=2 * b_pad * p * (obs_dim * h1 + h1 * h2 + action_dim * h2),
        transcendentals=0,
        bytes_accessed=(b * obs_dim * in_it + b * action_dim * act_it
                        + b * h2 * out_it + weight_bytes),
    )

    out_p = pl.pallas_call(
        _encoder_kernel,
        out_shape=jax.ShapeDtypeStruct((bp, h2p), out_dtype),
        grid=grid,
        in_specs=[
            row_spec(obs_dim * p),
            row_spec(action_dim * p),
            const_spec(w1),
            const_spec(b1),
            const_spec(w2o),
            const_spec(w2a),
            const_spec(b2b),
        ],
        out_specs=row_spec(h2p),
        compiler_params=pltpu.CompilerParams(
            dimension_semantics=("parallel",),
            vmem_limit_bytes=_VMEM_LIMIT_BYTES),
        cost_estimate=cost,
    )(obs_p, act_p, w1, b1, w2o, w2a, b2b)

    out = out_p.reshape(b_pad, h2)   # free row-major reshape back
    return out[:b] if b_pad != b else out


def init_params(key, obs_dim, action_dim, units, dtype=jnp.float32):
    """Deterministic init mimicking torch.nn.Linear (uniform +-1/sqrt(fan_in))."""
    h1, h2 = units
    k1, k2, k3, k4 = jax.random.split(key, 4)

    bound1 = 1.0 / math.sqrt(obs_dim)
    w1 = jax.random.uniform(k1, (obs_dim, h1), jnp.float32, -bound1, bound1)
    b1 = jax.random.uniform(k2, (1, h1), jnp.float32, -bound1, bound1)

    in2 = h1 + action_dim
    bound2 = 1.0 / math.sqrt(in2)
    w2 = jax.random.uniform(k3, (in2, h2), jnp.float32, -bound2, bound2)
    b2 = jax.random.uniform(k4, (1, h2), jnp.float32, -bound2, bound2)

    return {
        "w1": w1.astype(dtype),
        "b1": b1.astype(dtype),
        "w2_obs": w2[:h1, :].astype(dtype),   # W2 columns that multiply h
        "w2_act": w2[h1:, :].astype(dtype),   # W2 columns that multiply actions
        "b2": b2.astype(dtype),
    }


def reference(obs, actions, params):
    """Pure-JAX reference (f32 math) on the *unpacked* params."""
    f32 = lambda x: x.astype(jnp.float32)
    h = jnp.maximum(f32(obs) @ f32(params["w1"]) + f32(params["b1"]), 0.0)
    z = jnp.concatenate([h, f32(actions)], axis=-1)
    w2 = jnp.concatenate([f32(params["w2_obs"]), f32(params["w2_act"])], axis=0)
    return jnp.maximum(z @ w2 + f32(params["b2"]), 0.0)


if __name__ == "__main__":
    obs_dim, action_dim = 16, 8
    units = (32, 32)

    key = jax.random.PRNGKey(0)
    k_obs, k_act, k_params = jax.random.split(key, 3)
    params = init_params(k_params, obs_dim, action_dim, units)
    packed4 = pack_params(params, pack=4)     # out block = exactly 128 lanes

    # --- Test 1: tiny batch, f32, single grid step (pad only to pack=4) ---
    batch = 2
    obs = jax.random.normal(k_obs, (batch, obs_dim), jnp.float32)
    actions = jax.random.normal(k_act, (batch, action_dim), jnp.float32)
    out = jax.block_until_ready(
        state_action_encoder(obs, actions, packed4, pack=4))
    ref = reference(obs, actions, params)
    assert out.shape == (batch, units[-1])
    assert jnp.allclose(out, ref, atol=1e-5, rtol=1e-5)

    # --- Test 2: multi-step grid with a ragged last block (no batch pad copy) ---
    batch2 = 100
    obs2 = jax.random.normal(k_obs, (batch2, obs_dim), jnp.float32)
    act2 = jax.random.normal(k_act, (batch2, action_dim), jnp.float32)
    out2 = jax.block_until_ready(
        state_action_encoder(obs2, act2, packed4, pack=4, block_rows=64))
    ref2 = reference(obs2, act2, params)
    assert out2.shape == (batch2, units[-1])
    assert jnp.allclose(out2, ref2, atol=1e-5, rtol=1e-5)

    # --- Test 3: bf16 I/O + bf16 params (half the HBM traffic; f32 accumulate) ---
    params_bf16 = {k: v.astype(jnp.bfloat16) for k, v in params.items()}
    packed4_bf16 = pack_params(params_bf16, pack=4)
    out3 = jax.block_until_ready(
        state_action_encoder(obs2.astype(jnp.bfloat16),
                             act2.astype(jnp.bfloat16),
                             packed4_bf16, pack=4, block_rows=64))
    ref3 = reference(obs2, act2, params_bf16)  # f32 math on bf16-quantized data
    assert out3.dtype == jnp.bfloat16
    assert jnp.allclose(out3.astype(jnp.float32), ref3, atol=7e-2, rtol=7e-2)

    # --- Test 4: pack=8 (obs block exactly 128 lanes), larger ragged batch ---
    packed8 = pack_params(params, pack=8)
    batch4 = 1000
    obs4 = jax.random.normal(k_obs, (batch4, obs_dim), jnp.float32)
    act4 = jax.random.normal(k_act, (batch4, action_dim), jnp.float32)
    out4 = jax.block_until_ready(
        state_action_encoder(obs4, act4, packed8, pack=8, block_rows=256))
    ref4 = reference(obs4, act4, params)
    assert out4.shape == (batch4, units[-1])
    assert jnp.allclose(out4, ref4, atol=1e-5, rtol=1e-5)

    print("KERNEL_OK")
</pallas_src>

<mosaic_0001>
module attributes {stable_mosaic.version = 11 : i64} {
  func.func @_encoder_kernel(%arg0: i32, %arg1: memref<1x64xf32, #tpu.memory_space<vmem>>, %arg2: memref<1x32xf32, #tpu.memory_space<vmem>>, %arg3: memref<64x128xf32, #tpu.memory_space<vmem>>, %arg4: memref<1x128xf32, #tpu.memory_space<vmem>>, %arg5: memref<128x128xf32, #tpu.memory_space<vmem>>, %arg6: memref<32x128xf32, #tpu.memory_space<vmem>>, %arg7: memref<1x128xf32, #tpu.memory_space<vmem>>, %arg8: memref<1x128xf32, #tpu.memory_space<vmem>>) attributes {dimension_semantics = [#tpu.dimension_semantics<parallel>], iteration_bounds = array<i64: 1>, scalar_prefetch = 0 : i64, scratch_operands = 0 : i64, tpu.core_type = #tpu.core_type<tc>, window_params = [{transform_indices = @transform_0, window_bounds = array<i64: 1, 64>}, {transform_indices = @transform_1, window_bounds = array<i64: 1, 32>}, {pipeline_mode = #tpu.pipeline_mode<synchronous>, transform_indices = @transform_2, window_bounds = array<i64: 64, 128>}, {pipeline_mode = #tpu.pipeline_mode<synchronous>, transform_indices = @transform_3, window_bounds = array<i64: 1, 128>}, {pipeline_mode = #tpu.pipeline_mode<synchronous>, transform_indices = @transform_4, window_bounds = array<i64: 128, 128>}, {pipeline_mode = #tpu.pipeline_mode<synchronous>, transform_indices = @transform_5, window_bounds = array<i64: 32, 128>}, {pipeline_mode = #tpu.pipeline_mode<synchronous>, transform_indices = @transform_6, window_bounds = array<i64: 1, 128>}, {transform_indices = @transform_7, window_bounds = array<i64: 1, 128>}]} {
    %c0 = arith.constant 0 : index
    %c0_0 = arith.constant 0 : index
    %0 = vector.load %arg1[%c0, %c0_0] : memref<1x64xf32, #tpu.memory_space<vmem>>, vector<1x64xf32>
    %c0_1 = arith.constant 0 : index
    %c0_2 = arith.constant 0 : index
    %1 = vector.load %arg3[%c0_1, %c0_2] : memref<64x128xf32, #tpu.memory_space<vmem>>, vector<64x128xf32>
    %cst = arith.constant dense<0.000000e+00> : vector<1x128xf32>
    %2 = tpu.matmul %0, %1, %cst {dimension_numbers = #tpu.dot_dimension_numbers<[1], [0], [0], [1], [0, 0, 1, 1], [], []>} : vector<1x64xf32>, vector<64x128xf32>, vector<1x128xf32> -> vector<1x128xf32>
    %c0_3 = arith.constant 0 : index
    %c0_4 = arith.constant 0 : index
    %3 = vector.load %arg4[%c0_3, %c0_4] : memref<1x128xf32, #tpu.memory_space<vmem>>, vector<1x128xf32>
    %4 = arith.addf %2, %3 : vector<1x128xf32>
    %cst_5 = arith.constant 0.000000e+00 : f32
    %5 = vector.broadcast %cst_5 : f32 to vector<1x128xf32>
    %6 = arith.maximumf %4, %5 : vector<1x128xf32>
    %c0_6 = arith.constant 0 : index
    %c0_7 = arith.constant 0 : index
    %7 = vector.load %arg5[%c0_6, %c0_7] : memref<128x128xf32, #tpu.memory_space<vmem>>, vector<128x128xf32>
    %cst_8 = arith.constant dense<0.000000e+00> : vector<1x128xf32>
    %8 = tpu.matmul %6, %7, %cst_8 {dimension_numbers = #tpu.dot_dimension_numbers<[1], [0], [0], [1], [0, 0, 1, 1], [], []>} : vector<1x128xf32>, vector<128x128xf32>, vector<1x128xf32> -> vector<1x128xf32>
    %c0_9 = arith.constant 0 : index
    %c0_10 = arith.constant 0 : index
    %9 = vector.load %arg2[%c0_9, %c0_10] : memref<1x32xf32, #tpu.memory_space<vmem>>, vector<1x32xf32>
    %c0_11 = arith.constant 0 : index
    %c0_12 = arith.constant 0 : index
    %10 = vector.load %arg6[%c0_11, %c0_12] : memref<32x128xf32, #tpu.memory_space<vmem>>, vector<32x128xf32>
    %cst_13 = arith.constant dense<0.000000e+00> : vector<1x128xf32>
    %11 = tpu.matmul %9, %10, %cst_13 {dimension_numbers = #tpu.dot_dimension_numbers<[1], [0], [0], [1], [0, 0, 1, 1], [], []>} : vector<1x32xf32>, vector<32x128xf32>, vector<1x128xf32> -> vector<1x128xf32>
    %12 = arith.addf %8, %11 : vector<1x128xf32>
    %c0_14 = arith.constant 0 : index
    %c0_15 = arith.constant 0 : index
    %13 = vector.load %arg7[%c0_14, %c0_15] : memref<1x128xf32, #tpu.memory_space<vmem>>, vector<1x128xf32>
    %14 = arith.addf %12, %13 : vector<1x128xf32>
    %cst_16 = arith.constant 0.000000e+00 : f32
    %15 = vector.broadcast %cst_16 : f32 to vector<1x128xf32>
    %16 = arith.maximumf %14, %15 : vector<1x128xf32>
    %c0_17 = arith.constant 0 : index
    %c0_18 = arith.constant 0 : index
    %17 = vector.load %arg8[%c0_17, %c0_18] : memref<1x128xf32, #tpu.memory_space<vmem>>, vector<1x128xf32>
    tpu.vector_store %arg8[%c0_17, %c0_18], %16 {strides = array<i32>} : memref<1x128xf32, #tpu.memory_space<vmem>>, vector<1x128xf32>,
    return
  }
  func.func @transform_0(%arg0: i32) -> (i32, i32) {
    %c0_i32 = arith.constant 0 : i32
    %c0_i32_0 = arith.constant 0 : i32
    return %arg0, %c0_i32 : i32, i32
  }
  func.func @transform_1(%arg0: i32) -> (i32, i32) {
    %c0_i32 = arith.constant 0 : i32
    %c0_i32_0 = arith.constant 0 : i32
    return %arg0, %c0_i32 : i32, i32
  }
  func.func @transform_2(%arg0: i32) -> (i32, i32) {
    %c0_i32 = arith.constant 0 : i32
    %c0_i32_0 = arith.constant 0 : i32
    %c0_i32_1 = arith.constant 0 : i32
    return %c0_i32, %c0_i32_0 : i32, i32
  }
  func.func @transform_3(%arg0: i32) -> (i32, i32) {
    %c0_i32 = arith.constant 0 : i32
    %c0_i32_0 = arith.constant 0 : i32
    %c0_i32_1 = arith.constant 0 : i32
    return %c0_i32, %c0_i32_0 : i32, i32
  }
  func.func @transform_4(%arg0: i32) -> (i32, i32) {
    %c0_i32 = arith.constant 0 : i32
    %c0_i32_0 = arith.constant 0 : i32
    %c0_i32_1 = arith.constant 0 : i32
    return %c0_i32, %c0_i32_0 : i32, i32
  }
  func.func @transform_5(%arg0: i32) -> (i32, i32) {
    %c0_i32 = arith.constant 0 : i32
    %c0_i32_0 = arith.constant 0 : i32
    %c0_i32_1 = arith.constant 0 : i32
    return %c0_i32, %c0_i32_0 : i32, i32
  }
  func.func @transform_6(%arg0: i32) -> (i32, i32) {
    %c0_i32 = arith.constant 0 : i32
    %c0_i32_0 = arith.constant 0 : i32
    %c0_i32_1 = arith.constant 0 : i32
    return %c0_i32, %c0_i32_0 : i32, i32
  }
  func.func @transform_7(%arg0: i32) -> (i32, i32) {
    %c0_i32 = arith.constant 0 : i32
    %c0_i32_0 = arith.constant 0 : i32
    return %arg0, %c0_i32 : i32, i32
  }
}

</mosaic_0001>

<llo_original>
// kernel: tpu_custom_call.1
$region0: #{tpu_custom_call.1}
  #allocation0 [shape = 'u32[]', space=smem, size = 0x4, offset = 0x4, fixed_abs, tag = 'smem constant byte address 0x4 - core index']
  #allocation1 [shape = 'u32[144,128]{1,0:T(1,128)}', space=vmem, size = 0x12000, scoped, tag = 'internal scratch']
  %s0 = inlined_call_operand.hbm [shape: f32[1,64], index: 0, kind: input, shape index: {}]
  %s1 = inlined_call_operand.vmem [shape: f32[1,32], index: 1, kind: input, shape index: {}]
  %s2 = inlined_call_operand.hbm [shape: f32[64,128], index: 2, kind: input, shape index: {}]
  %s3 = inlined_call_operand.vmem [shape: f32[1,128], index: 3, kind: input, shape index: {}]
  %s4 = inlined_call_operand.hbm [shape: f32[128,128], index: 4, kind: input, shape index: {}]
  %s5 = inlined_call_operand.hbm [shape: f32[32,128], index: 5, kind: input, shape index: {}]
  %s6 = inlined_call_operand.vmem [shape: f32[1,128], index: 6, kind: input, shape index: {}]
  %s7 = inlined_call_operand.hbm [shape: f32[1,128], index: 7, kind: output, shape index: {}]
  %s8 = sld [smem:[#allocation0]]
  $region54: #{tpu_custom_call.1} parent=0
    _
  %s10 = ssub.s32 1, %s8
  %s11 = scalar_select 0, %s10, %s8
  $region1: #{tpu_custom_call.1} parent=0
    #allocation2 [shape = 'u8[512]{0}', space=vmem, size = 0x400, scoped, tag = 'input window, operand 0, single buffered']
    #allocation3 [shape = 's32[1]{0}', space=sflag, size = 0x4, scoped, tag = 'scoped memory for tpu_custom_call.1']
    #allocation4 [shape = 's32[1]{0}', space=sflag, size = 0x4, scoped, tag = 'scoped memory for tpu_custom_call.1']
    #allocation5 [shape = 'u8[32768]{0}', space=vmem, size = 0x8000, scoped, tag = 'input window, operand 2, single buffered']
    #allocation6 [shape = 's32[1]{0}', space=sflag, size = 0x4, scoped, tag = 'scoped memory for tpu_custom_call.1']
    #allocation7 [shape = 'u8[65536]{0}', space=vmem, size = 0x10000, scoped, tag = 'input window, operand 4, single buffered']
    #allocation8 [shape = 'u8[16384]{0}', space=vmem, size = 0x4000, scoped, tag = 'input window, operand 5, single buffered']
    #allocation9 [shape = 's32[1]{0}', space=sflag, size = 0x4, scoped, tag = 'scoped memory for tpu_custom_call.1']
    #allocation10 [shape = 'u8[512]{0}', space=vmem, size = 0x400, scoped, tag = 'output window, operand 0, single buffered']
    %12 = vsyncpa [#allocation3], 0
    %13 = vsyncpa [#allocation6], 0
    %14 = vsyncpa [#allocation9], 0
    %15 = vsyncpa [#allocation4], 0
    // Predicated region
    $region2: #{tpu_custom_call.1} parent=1 // pred_check
      _
    $region3: #{tpu_custom_call.1} parent=1 // pred_check_branch
      %17 = sbr.rel (0) target = $region5
    $region4: #{tpu_custom_call.1} parent=1 // pred_region
      %s19 = ssub.s32 16, 16
      %20 = vsyncadd [#allocation3], %s19
      %s22 = sshll.u32 [#allocation2], 4
      %s23 = int_to_ptr.vmem [resolvable:$true] %s22
      %25 = dma.hbm_to_vmem [thread:$0]  %s0, 16, %s23, [#allocation3]
    $region5: #{tpu_custom_call.1} parent=1 // pred_fallthru
      _
    // Predicated region
    $region6: #{tpu_custom_call.1} parent=1 // pred_check
      _
    $region7: #{tpu_custom_call.1} parent=1 // pred_check_branch
      %27 = sbr.rel (0) target = $region9
    $region8: #{tpu_custom_call.1} parent=1 // pred_region
      _
    $region9: #{tpu_custom_call.1} parent=1 // pred_fallthru
      _
    // Predicated region
    $region10: #{tpu_custom_call.1} parent=1 // pred_check
      _
    $region11: #{tpu_custom_call.1} parent=1 // pred_check_branch
      %29 = sbr.rel (0) target = $region13
    $region12: #{tpu_custom_call.1} parent=1 // pred_region
      %s31 = ssub.s32 1024, 1024
      %32 = vsyncadd [#allocation6], %s31
      %s33 = sshll.u32 [#allocation5], 4
      %s34 = int_to_ptr.vmem [resolvable:$true] %s33
      %39 = dma.hbm_to_vmem [thread:$0]  %s2, 1024, %s34, [#allocation6], 128, 128, 8
    $region13: #{tpu_custom_call.1} parent=1 // pred_fallthru
      _
    // Predicated region
    $region14: #{tpu_custom_call.1} parent=1 // pred_check
      _
    $region15: #{tpu_custom_call.1} parent=1 // pred_check_branch
      %41 = sbr.rel (0) target = $region17
    $region16: #{tpu_custom_call.1} parent=1 // pred_region
      _
    $region17: #{tpu_custom_call.1} parent=1 // pred_fallthru
      _
    // Predicated region
    $region18: #{tpu_custom_call.1} parent=1 // pred_check
      _
    $region19: #{tpu_custom_call.1} parent=1 // pred_check_branch
      %43 = sbr.rel (0) target = $region21
    $region20: #{tpu_custom_call.1} parent=1 // pred_region
      %s45 = ssub.s32 2048, 2048
      %46 = vsyncadd [#allocation6], %s45
      %s47 = sshll.u32 [#allocation7], 4
      %s48 = int_to_ptr.vmem [resolvable:$true] %s47
      %53 = dma.hbm_to_vmem [thread:$0]  %s4, 2048, %s48, [#allocation6], 128, 128, 8
    $region21: #{tpu_custom_call.1} parent=1 // pred_fallthru
      _
    // Predicated region
    $region22: #{tpu_custom_call.1} parent=1 // pred_check
      _
    $region23: #{tpu_custom_call.1} parent=1 // pred_check_branch
      %55 = sbr.rel (0) target = $region25
    $region24: #{tpu_custom_call.1} parent=1 // pred_region
      %s57 = ssub.s32 512, 512
      %58 = vsyncadd [#allocation9], %s57
      %s59 = sshll.u32 [#allocation8], 4
      %s60 = int_to_ptr.vmem [resolvable:$true] %s59
      %65 = dma.hbm_to_vmem [thread:$0]  %s5, 512, %s60, [#allocation9], 128, 128, 8
    $region25: #{tpu_custom_call.1} parent=1 // pred_fallthru
      _
    // Predicated region
    $region26: #{tpu_custom_call.1} parent=1 // pred_check
      _
    $region27: #{tpu_custom_call.1} parent=1 // pred_check_branch
      %67 = sbr.rel (0) target = $region29
    $region28: #{tpu_custom_call.1} parent=1 // pred_region
      _
    $region29: #{tpu_custom_call.1} parent=1 // pred_fallthru
      _
    // Predicated region
    $region30: #{tpu_custom_call.1} parent=1 // pred_check
      _
    $region31: #{tpu_custom_call.1} parent=1 // pred_check_branch
      %69 = sbr.rel (0) target = $region33
    $region32: #{tpu_custom_call.1} parent=1 // pred_region
      %70 = dma.done [#allocation3], 16
    $region33: #{tpu_custom_call.1} parent=1 // pred_fallthru
      _
    // Predicated region
    $region34: #{tpu_custom_call.1} parent=1 // pred_check
      _
    $region35: #{tpu_custom_call.1} parent=1 // pred_check_branch
      %72 = sbr.rel (0) target = $region37
    $region36: #{tpu_custom_call.1} parent=1 // pred_region
      %73 = dma.done [#allocation6], 1024
    $region37: #{tpu_custom_call.1} parent=1 // pred_fallthru
      _
    // Predicated region
    $region38: #{tpu_custom_call.1} parent=1 // pred_check
      _
    $region39: #{tpu_custom_call.1} parent=1 // pred_check_branch
      %75 = sbr.rel (0) target = $region41
    $region40: #{tpu_custom_call.1} parent=1 // pred_region
      %76 = dma.done [#allocation6], 2048
    $region41: #{tpu_custom_call.1} parent=1 // pred_fallthru
      _
    // Predicated region
    $region42: #{tpu_custom_call.1} parent=1 // pred_check
      _
    $region43: #{tpu_custom_call.1} parent=1 // pred_check_branch
      %78 = sbr.rel (0) target = $region45
    $region44: #{tpu_custom_call.1} parent=1 // pred_region
      %79 = dma.done [#allocation9], 512
    $region45: #{tpu_custom_call.1} parent=1 // pred_fallthru
      _
    %v80 = vld [vmem:[#allocation2] sm:$0x1]
    %v81 = vld [vmem:[#allocation5] sm:$0xff]
    %v82 = vld [vmem:[#allocation5 + $0x8] sm:$0xff]
    %v83 = vld [vmem:[#allocation5 + $0x10] sm:$0xff]
    %v84 = vld [vmem:[#allocation5 + $0x18] sm:$0xff]
    %v85 = vld [vmem:[#allocation5 + $0x20] sm:$0xff]
    %v86 = vld [vmem:[#allocation5 + $0x28] sm:$0xff]
    %v87 = vld [vmem:[#allocation5 + $0x30] sm:$0xff]
    %v88 = vld [vmem:[#allocation5 + $0x38] sm:$0xff]
    %v89 = vld [vmem:[%s3] sm:$0x1]
    %vm90 = vcmask 523264
    %v92 = vsel %vm90, %v80, 0
    %94 = vmatprep.subr.mxu0 0.0
    %95 = vmatpush1.msra.mxu0 0.0
    %96 = vmatprep.subr.mxu0 0.0
    %97 = vmatpush1.msra.mxu0 0.0
    %98 = vmatprep.subr.mxu0 0.0
    %99 = vmatpush1.msra.mxu0 0.0
    %100 = vmatprep.subr.mxu0 0.0
    %101 = vmatpush1.msra.mxu0 0.0
    %102 = vmatprep.subr.mxu0 0.0
    %103 = vmatpush1.msra.mxu0 0.0
    %104 = vmatprep.subr.mxu0 0.0
    %105 = vmatpush1.msra.mxu0 0.0
    %106 = vmatprep.subr.mxu0 0.0
    %107 = vmatpush1.msra.mxu0 0.0
    %108 = vmatprep.subr.mxu0 0.0
    %109 = vmatpush1.msra.mxu0 0.0
    %110 = vmatprep.subr.mxu0 0.0
    %111 = vmatpush1.msra.mxu0 %v88
    %112 = vmatprep.subr.mxu0 0.0
    %113 = vmatpush1.msra.mxu0 %v87
    %114 = vmatprep.subr.mxu0 0.0
    %115 = vmatpush1.msra.mxu0 %v86
    %116 = vmatprep.subr.mxu0 0.0
    %117 = vmatpush1.msra.mxu0 %v85
    %118 = vmatprep.subr.mxu0 0.0
    %119 = vmatpush1.msra.mxu0 %v84
    %120 = vmatprep.subr.mxu0 0.0
    %121 = vmatpush1.msra.mxu0 %v83
    %122 = vmatprep.subr.mxu0 0.0
    %123 = vmatpush1.msra.mxu0 %v82
    %124 = vmatprep.subr.mxu0 0.0
    %125 = vmatpush1.msra.mxu0 %v81
    %126 = vmatprep.subr.mxu0 0.0
    %127 = vmatpush2.msra.mxu0 0.0
    %128 = vmatprep.subr.mxu0 0.0
    %129 = vmatpush2.msra.mxu0 0.0
    %130 = vmatprep.subr.mxu0 0.0
    %131 = vmatpush2.msra.mxu0 0.0
    %132 = vmatprep.subr.mxu0 0.0
    %133 = vmatpush2.msra.mxu0 0.0
    %134 = vmatprep.subr.mxu0 0.0
    %135 = vmatpush2.msra.mxu0 0.0
    %136 = vmatprep.subr.mxu0 0.0
    %137 = vmatpush2.msra.mxu0 0.0
    %138 = vmatprep.subr.mxu0 0.0
    %139 = vmatpush2.msra.mxu0 0.0
    %140 = vmatprep.subr.mxu0 0.0
    %141 = vmatpush2.msra.mxu0 0.0
    %142 = vmatprep.subr.mxu0 0.0
    %143 = vmatpush2.msra.mxu0 0.0
    %144 = vmatprep.subr.mxu0 0.0
    %145 = vmatpush2.msra.mxu0 0.0
    %146 = vmatprep.subr.mxu0 0.0
    %147 = vmatpush2.msra.mxu0 0.0
    %148 = vmatprep.subr.mxu0 0.0
    %149 = vmatpush2.msra.mxu0 0.0
    %150 = vmatprep.subr.mxu0 0.0
    %151 = vmatpush2.msra.mxu0 0.0
    %152 = vmatprep.subr.mxu0 0.0
    %153 = vmatpush2.msra.mxu0 0.0
    %154 = vmatprep.subr.mxu0 0.0
    %155 = vmatpush2.msra.mxu0 0.0
    %156 = vmatprep.subr.mxu0 0.0
    %157 = vmatpush2.msra.mxu0 0.0
    %158 = vmatprep.mubr.f32.mxu0 0.0
    %159 = vmatmul.mubr.f32.gmra.mxu0 %v92
    %v160 = vpop.f32.mrf.mxu0
    %v161 = vadd.f32 %v89, %v160
    %v162 = vpop.f32.mrf.mxu0
    %163 = vdwg.mxu0
    %v164 = vmax.f32 %v161, 0.0
    %v165 = vld [vmem:[#allocation7] sm:$0xff]
    %v166 = vld [vmem:[#allocation7 + $0x8] sm:$0xff]
    %v167 = vld [vmem:[#allocation7 + $0x10] sm:$0xff]
    %v168 = vld [vmem:[#allocation7 + $0x18] sm:$0xff]
    %v169 = vld [vmem:[#allocation7 + $0x20] sm:$0xff]
    %v170 = vld [vmem:[#allocation7 + $0x28] sm:$0xff]
    %v171 = vld [vmem:[#allocation7 + $0x30] sm:$0xff]
    %v172 = vld [vmem:[#allocation7 + $0x38] sm:$0xff]
    %v173 = vld [vmem:[#allocation7 + $0x40] sm:$0xff]
    %v174 = vld [vmem:[#allocation7 + $0x48] sm:$0xff]
    %v175 = vld [vmem:[#allocation7 + $0x50] sm:$0xff]
    %v176 = vld [vmem:[#allocation7 + $0x58] sm:$0xff]
    %v177 = vld [vmem:[#allocation7 + $0x60] sm:$0xff]
    %v178 = vld [vmem:[#allocation7 + $0x68] sm:$0xff]
    %v179 = vld [vmem:[#allocation7 + $0x70] sm:$0xff]
    %v180 = vld [vmem:[#allocation7 + $0x78] sm:$0xff]
    %v181 = vld [vmem:[%s1] sm:$0x1]
    %v182 = vld [vmem:[#allocation8] sm:$0xff]
    %v183 = vld [vmem:[#allocation8 + $0x8] sm:$0xff]
    %v184 = vld [vmem:[#allocation8 + $0x10] sm:$0xff]
    %v185 = vld [vmem:[#allocation8 + $0x18] sm:$0xff]
    %vm186 = vcmask 261120
    %v188 = vsel %vm186, %v181, 0
    %190 = vmatprep.subr.mxu0 0.0
    %191 = vmatpush1.msra.mxu0 0.0
    %192 = vmatprep.subr.mxu0 0.0
    %193 = vmatpush1.msra.mxu0 0.0
    %194 = vmatprep.subr.mxu0 0.0
    %195 = vmatpush1.msra.mxu0 0.0
    %196 = vmatprep.subr.mxu0 0.0
    %197 = vmatpush1.msra.mxu0 0.0
    %198 = vmatprep.subr.mxu0 0.0
    %199 = vmatpush1.msra.mxu0 0.0
    %200 = vmatprep.subr.mxu0 0.0
    %201 = vmatpush1.msra.mxu0 0.0
    %202 = vmatprep.subr.mxu0 0.0
    %203 = vmatpush1.msra.mxu0 0.0
    %204 = vmatprep.subr.mxu0 0.0
    %205 = vmatpush1.msra.mxu0 0.0
    %206 = vmatprep.subr.mxu0 0.0
    %207 = vmatpush1.msra.mxu0 0.0
    %208 = vmatprep.subr.mxu0 0.0
    %209 = vmatpush1.msra.mxu0 0.0
    %210 = vmatprep.subr.mxu0 0.0
    %211 = vmatpush1.msra.mxu0 0.0
    %212 = vmatprep.subr.mxu0 0.0
    %213 = vmatpush1.msra.mxu0 0.0
    %214 = vmatprep.subr.mxu0 0.0
    %215 = vmatpush1.msra.mxu0 %v185
    %216 = vmatprep.subr.mxu0 0.0
    %217 = vmatpush1.msra.mxu0 %v184
    %218 = vmatprep.subr.mxu0 0.0
    %219 = vmatpush1.msra.mxu0 %v183
    %220 = vmatprep.subr.mxu0 0.0
    %221 = vmatpush1.msra.mxu0 %v182
    %222 = vmatprep.subr.mxu0 0.0
    %223 = vmatpush2.msra.mxu0 0.0
    %224 = vmatprep.subr.mxu0 0.0
    %225 = vmatpush2.msra.mxu0 0.0
    %226 = vmatprep.subr.mxu0 0.0
    %227 = vmatpush2.msra.mxu0 0.0
    %228 = vmatprep.subr.mxu0 0.0
    %229 = vmatpush2.msra.mxu0 0.0
    %230 = vmatprep.subr.mxu0 0.0
    %231 = vmatpush2.msra.mxu0 0.0
    %232 = vmatprep.subr.mxu0 0.0
    %233 = vmatpush2.msra.mxu0 0.0
    %234 = vmatprep.subr.mxu0 0.0
    %235 = vmatpush2.msra.mxu0 0.0
    %236 = vmatprep.subr.mxu0 0.0
    %237 = vmatpush2.msra.mxu0 0.0
    %238 = vmatprep.subr.mxu0 0.0
    %239 = vmatpush2.msra.mxu0 0.0
    %240 = vmatprep.subr.mxu0 0.0
    %241 = vmatpush2.msra.mxu0 0.0
    %242 = vmatprep.subr.mxu0 0.0
    %243 = vmatpush2.msra.mxu0 0.0
    %244 = vmatprep.subr.mxu0 0.0
    %245 = vmatpush2.msra.mxu0 0.0
    %246 = vmatprep.subr.mxu0 0.0
    %247 = vmatpush2.msra.mxu0 0.0
    %248 = vmatprep.subr.mxu0 0.0
    %249 = vmatpush2.msra.mxu0 0.0
    %250 = vmatprep.subr.mxu0 0.0
    %251 = vmatpush2.msra.mxu0 0.0
    %252 = vmatprep.subr.mxu0 0.0
    %253 = vmatpush2.msra.mxu0 0.0
    %254 = vmatprep.mubr.f32.mxu0 0.0
    %255 = vmatmul.mubr.f32.gmra.mxu0 %v188
    %v256 = vpop.f32.mrf.mxu0
    %v257 = vadd.f32 0.0, %v256
    %v258 = vpop.f32.mrf.mxu0
    %259 = vdwg.mxu0
    %260 = vmatprep.subr.mxu0 0.0
    %261 = vmatpush1.msra.mxu0 %v180
    %262 = vmatprep.subr.mxu0 0.0
    %263 = vmatpush1.msra.mxu0 %v179
    %264 = vmatprep.subr.mxu0 0.0
    %265 = vmatpush1.msra.mxu0 %v178
    %266 = vmatprep.subr.mxu0 0.0
    %267 = vmatpush1.msra.mxu0 %v177
    %268 = vmatprep.subr.mxu0 0.0
    %269 = vmatpush1.msra.mxu0 %v176
    %270 = vmatprep.subr.mxu0 0.0
    %271 = vmatpush1.msra.mxu0 %v175
    %272 = vmatprep.subr.mxu0 0.0
    %273 = vmatpush1.msra.mxu0 %v174
    %274 = vmatprep.subr.mxu0 0.0
    %275 = vmatpush1.msra.mxu0 %v173
    %276 = vmatprep.subr.mxu0 0.0
    %277 = vmatpush1.msra.mxu0 %v172
    %278 = vmatprep.subr.mxu0 0.0
    %279 = vmatpush1.msra.mxu0 %v171
    %280 = vmatprep.subr.mxu0 0.0
    %281 = vmatpush1.msra.mxu0 %v170
    %282 = vmatprep.subr.mxu0 0.0
    %283 = vmatpush1.msra.mxu0 %v169
    %284 = vmatprep.subr.mxu0 0.0
    %285 = vmatpush1.msra.mxu0 %v168
    %286 = vmatprep.subr.mxu0 0.0
    %287 = vmatpush1.msra.mxu0 %v167
    %288 = vmatprep.subr.mxu0 0.0
    %289 = vmatpush1.msra.mxu0 %v166
    %290 = vmatprep.subr.mxu0 0.0
    %291 = vmatpush1.msra.mxu0 %v165
    %292 = vmatprep.subr.mxu0 0.0
    %293 = vmatpush2.msra.mxu0 0.0
    %294 = vmatprep.subr.mxu0 0.0
    %295 = vmatpush2.msra.mxu0 0.0
    %296 = vmatprep.subr.mxu0 0.0
    %297 = vmatpush2.msra.mxu0 0.0
    %298 = vmatprep.subr.mxu0 0.0
    %299 = vmatpush2.msra.mxu0 0.0
    %300 = vmatprep.subr.mxu0 0.0
    %301 = vmatpush2.msra.mxu0 0.0
    %302 = vmatprep.subr.mxu0 0.0
    %303 = vmatpush2.msra.mxu0 0.0
    %304 = vmatprep.subr.mxu0 0.0
    %305 = vmatpush2.msra.mxu0 0.0
    %306 = vmatprep.subr.mxu0 0.0
    %307 = vmatpush2.msra.mxu0 0.0
    %308 = vmatprep.subr.mxu0 0.0
    %309 = vmatpush2.msra.mxu0 0.0
    %310 = vmatprep.subr.mxu0 0.0
    %311 = vmatpush2.msra.mxu0 0.0
    %312 = vmatprep.subr.mxu0 0.0
    %313 = vmatpush2.msra.mxu0 0.0
    %314 = vmatprep.subr.mxu0 0.0
    %315 = vmatpush2.msra.mxu0 0.0
    %316 = vmatprep.subr.mxu0 0.0
    %317 = vmatpush2.msra.mxu0 0.0
    %318 = vmatprep.subr.mxu0 0.0
    %319 = vmatpush2.msra.mxu0 0.0
    %320 = vmatprep.subr.mxu0 0.0
    %321 = vmatpush2.msra.mxu0 0.0
    %322 = vmatprep.subr.mxu0 0.0
    %323 = vmatpush2.msra.mxu0 0.0
    %324 = vmatprep.mubr.f32.mxu0 0.0
    %325 = vmatmul.mubr.f32.gmra.mxu0 %v164
    %v326 = vpop.f32.mrf.mxu0
    %v327 = vadd.f32 %v257, %v326
    %v328 = vpop.f32.mrf.mxu0
    %329 = vdwg.mxu0
    %v330 = vld [vmem:[%s6] sm:$0x1]
    %v331 = vadd.f32 %v327, %v330
    %v332 = vmax.f32 %v331, 0.0
    %333 = vst [vmem:[#allocation10] sm:$0x1] %v332
    // Predicated region
    $region46: #{tpu_custom_call.1} parent=1 // pred_check
      _
    $region47: #{tpu_custom_call.1} parent=1 // pred_check_branch
      %335 = sbr.rel (0) target = $region49
    $region48: #{tpu_custom_call.1} parent=1 // pred_region
      %s337 = ssub.s32 16, 16
      %338 = vsyncadd [#allocation4], %s337
      %s340 = sshll.u32 [#allocation10], 4
      %s341 = int_to_ptr.vmem [resolvable:$true] %s340
      %343 = dma.vmem_to_hbm [thread:$0]  %s341, 16, %s7, [#allocation4]
    $region49: #{tpu_custom_call.1} parent=1 // pred_fallthru
      _
    // Predicated region
    $region50: #{tpu_custom_call.1} parent=1 // pred_check
      _
    $region51: #{tpu_custom_call.1} parent=1 // pred_check_branch
      %345 = sbr.rel (0) target = $region53
    $region52: #{tpu_custom_call.1} parent=1 // pred_region
      %346 = dma.done [#allocation4], 16
    $region53: #{tpu_custom_call.1} parent=1 // pred_fallthru
      _
    %347 = vsyncpa [#allocation3], 1
    %348 = vsyncpa [#allocation6], 1
    %349 = vsyncpa [#allocation9], 1
    %350 = vsyncpa [#allocation4], 1

</llo_original>
